<compile_context>
chip_gen: v6e
topology: v6e:2x2x1
jax: 0.10.0
libtpu: 0.0.40
codegen_flags: <defaults>
</compile_context>

<pallas_src>
import functools

import jax
import jax.numpy as jnp
from jax.experimental import pallas as pl
from jax.experimental.pallas import tpu as pltpu

H1 = 500        # true FC1 width (PyTorch semantics)
H1_PAD = 512    # lane/sublane-aligned FC1 width used inside the kernel
H2 = 128        # FC2 width (already aligned)


def _round_up(x, m):
    return (x + m - 1) // m * m


def actor_net_kernel(obs_ref, w1_ref, b1_ref, w2_ref, b2_ref, w3_ref, b3_ref,
                     out_ref):
    # Weights may be bf16 or f32; accumulation is always f32 on the MXU.
    # Biases stay f32.  Activations are cast back to the weight dtype before
    # each dot so the bf16 path feeds the MXU natively.
    x = obs_ref[...]

    # FC1 + relu (padded cols of w1/b1 are zero -> relu(0) = 0, inert)
    h1 = jnp.dot(x, w1_ref[...], preferred_element_type=jnp.float32) + b1_ref[...]
    h1 = jnp.maximum(h1, 0.0)

    # FC2 + relu (padded rows of w2 are zero -> padded h1 lanes contribute 0)
    h2 = jnp.dot(h1.astype(w2_ref.dtype), w2_ref[...],
                 preferred_element_type=jnp.float32) + b2_ref[...]
    h2 = jnp.maximum(h2, 0.0)

    # FC3 + tanh into a lane-dense (tb, OUT_PAD) block; padded output lanes
    # are tanh(0) = 0 and get sliced off (or ignored) in the wrapper.
    h3 = jnp.dot(h2.astype(w3_ref.dtype), w3_ref[...],
                 preferred_element_type=jnp.float32) + b3_ref[...]
    out_ref[...] = jnp.tanh(h3).astype(out_ref.dtype)


def actor_net_forward(obs, params, *, block_b=512, use_bf16=True,
                      min_grid_steps=2, return_padded=False):
    """obs: (B, dim_observation) f32. params: pre-transposed PyTorch weights.

    use_bf16: cast obs/weights to bfloat16 for the MXU (f32 accumulation).
    min_grid_steps: keep >=2 grid steps when B is large enough so the
      "parallel" axis shards across both v7x TensorCores.
    return_padded: return the lane-dense (B_pad, OUT_PAD) slab (caller slices /
      fuses), avoiding the extra XLA copy of the output.
    """
    w1, b1 = params["w1"], params["b1"]   # (obs, 500), (1, 500)
    w2, b2 = params["w2"], params["b2"]   # (500, 128), (1, 128)
    w3, b3 = params["w3"], params["b3"]   # (128, act), (1, act)

    B, dim_obs = obs.shape
    dim_action = w3.shape[1]
    out_pad = _round_up(max(dim_action, 1), 128)   # lane-dense output width

    # ---- pad weights/biases to aligned shapes (zeros => numerically inert) ----
    w1p = jnp.pad(w1, ((0, 0), (0, H1_PAD - H1)))
    b1p = jnp.pad(b1, ((0, 0), (0, H1_PAD - H1)))
    w2p = jnp.pad(w2, ((0, H1_PAD - H1), (0, 0)))
    b2p = b2
    w3p = jnp.pad(w3, ((0, 0), (0, out_pad - dim_action)))
    b3p = jnp.pad(b3, ((0, 0), (0, out_pad - dim_action)))

    mat_dtype = jnp.bfloat16 if use_bf16 else jnp.float32
    w1p = w1p.astype(mat_dtype)
    w2p = w2p.astype(mat_dtype)
    w3p = w3p.astype(mat_dtype)

    # ---- batch tile: smallest 8-aligned tile covering B in n_steps steps ----
    n_steps = pl.cdiv(B, block_b)
    if min_grid_steps > 1 and B > 8 * (min_grid_steps - 1):
        n_steps = max(n_steps, min_grid_steps)     # keep both v7x TCs busy
    tb = _round_up(pl.cdiv(B, n_steps), 8)
    B_pad = _round_up(B, tb)
    obs_p = jnp.pad(obs, ((0, B_pad - B), (0, 0))).astype(mat_dtype)

    grid = (B_pad // tb,)

    # ---- cost estimate + explicit VMEM budget ----
    flops = 2 * B_pad * (dim_obs * H1_PAD + H1_PAD * H2 + H2 * out_pad)
    isz = 2 if use_bf16 else 4
    weight_bytes = isz * (dim_obs * H1_PAD + H1_PAD * H2 + H2 * out_pad)
    bias_bytes = 4 * (H1_PAD + H2 + out_pad)
    bytes_accessed = isz * B_pad * dim_obs + 4 * B_pad * out_pad \
        + weight_bytes + bias_bytes
    cost = pl.CostEstimate(flops=flops,
                           transcendentals=B_pad * out_pad,
                           bytes_accessed=bytes_accessed)

    # Footprint: 2x resident weights/biases (double-buffer safety), 2x obs tile,
    # 2x out tile, plus f32 + weight-dtype activation intermediates.
    act_bytes = tb * (2 * dim_obs * isz + 2 * out_pad * 4
                      + (H1_PAD + H2) * (4 + isz))
    footprint = 2 * (weight_bytes + bias_bytes) + act_bytes
    vmem_limit = min(128 << 20, max(32 << 20, int(footprint * 1.5)))
    # TODO(synk): for dim_obs >~ 8-16K, tile FC1 over K with an extra
    # "arbitrary" grid axis instead of keeping the whole w1 VMEM-resident.

    out_p = pl.pallas_call(
        actor_net_kernel,
        out_shape=jax.ShapeDtypeStruct((B_pad, out_pad), jnp.float32),
        grid=grid,
        in_specs=[
            # obs tiled over the batch grid; feature dim stays whole.
            pl.BlockSpec((tb, dim_obs), lambda i: (i, 0)),
            # weights/biases: whole-array blocks, VMEM-resident across the grid.
            pl.BlockSpec((dim_obs, H1_PAD), lambda i: (0, 0)),
            pl.BlockSpec((1, H1_PAD), lambda i: (0, 0)),
            pl.BlockSpec((H1_PAD, H2), lambda i: (0, 0)),
            pl.BlockSpec((1, H2), lambda i: (0, 0)),
            pl.BlockSpec((H2, out_pad), lambda i: (0, 0)),
            pl.BlockSpec((1, out_pad), lambda i: (0, 0)),
        ],
        out_specs=pl.BlockSpec((tb, out_pad), lambda i: (i, 0)),
        compiler_params=pltpu.CompilerParams(
            dimension_semantics=("parallel",),
            vmem_limit_bytes=vmem_limit),
        cost_estimate=cost,
    )(obs_p, w1p, b1p, w2p, b2p, w3p, b3p)

    if return_padded:
        return out_p          # (B_pad, out_pad); caller slices / fuses
    return out_p[:B, :dim_action]


def init_actor_params(key, dim_observation, dim_action):
    """Init mimicking PyTorch nn.Linear default U[-1/sqrt(fan_in), +1/sqrt(fan_in)].

    Weights stored pre-transposed as (in, out) so the kernel computes x @ W + b.
    """
    def linear_init(k, fan_in, fan_out):
        kw, kb = jax.random.split(k)
        bound = 1.0 / jnp.sqrt(jnp.float32(fan_in))
        w = jax.random.uniform(kw, (fan_in, fan_out), jnp.float32, -bound, bound)
        b = jax.random.uniform(kb, (1, fan_out), jnp.float32, -bound, bound)
        return w, b

    k1, k2, k3 = jax.random.split(key, 3)
    w1, b1 = linear_init(k1, dim_observation, H1)
    w2, b2 = linear_init(k2, H1, H2)
    w3, b3 = linear_init(k3, H2, dim_action)
    return {"w1": w1, "b1": b1, "w2": w2, "b2": b2, "w3": w3, "b3": b3}


def actor_net_ref(obs, p):
    """Pure-JAX f32 reference (unpadded), matches the PyTorch module."""
    h = jnp.maximum(obs @ p["w1"] + p["b1"], 0.0)
    h = jnp.maximum(h @ p["w2"] + p["b2"], 0.0)
    return jnp.tanh(h @ p["w3"] + p["b3"])


if __name__ == "__main__":
    dim_observation = 16
    dim_action = 4
    batch = 2

    key = jax.random.PRNGKey(0)
    k_obs, k_params, k_obs2 = jax.random.split(key, 3)

    obs = jax.random.normal(k_obs, (batch, dim_observation), jnp.float32)
    params = init_actor_params(k_params, dim_observation, dim_action)
    ref = actor_net_ref(obs, params)

    # 1) exact-f32 path: bit-match-grade check against the reference.
    fwd_f32 = jax.jit(functools.partial(actor_net_forward, use_bf16=False))
    out_f32 = jax.block_until_ready(fwd_f32(obs, params))
    assert out_f32.shape == (batch, dim_action), out_f32.shape
    assert jnp.allclose(out_f32, ref, atol=1e-5, rtol=1e-5), "f32 mismatch"

    # 2) default bf16 MXU path: relaxed tolerance vs the f32 reference.
    fwd_bf16 = jax.jit(functools.partial(actor_net_forward, use_bf16=True))
    out_bf16 = jax.block_until_ready(fwd_bf16(obs, params))
    assert out_bf16.shape == (batch, dim_action), out_bf16.shape
    assert jnp.allclose(out_bf16, ref, atol=2e-2, rtol=2e-2), "bf16 mismatch"

    # 3) larger ragged batch exercises the fixed tile selection and grid > 1.
    obs2 = jax.random.normal(k_obs2, (20, dim_observation), jnp.float32)
    out2 = jax.block_until_ready(fwd_bf16(obs2, params))
    ref2 = actor_net_ref(obs2, params)
    assert out2.shape == (20, dim_action), out2.shape
    assert jnp.allclose(out2, ref2, atol=2e-2, rtol=2e-2), "bf16 batch mismatch"

    print("KERNEL_OK")
</pallas_src>

<mosaic_0001>
module attributes {stable_mosaic.version = 11 : i64} {
  func.func @actor_net_kernel(%arg0: i32, %arg1: memref<8x16xf32, #tpu.memory_space<vmem>>, %arg2: memref<16x512xf32, #tpu.memory_space<vmem>>, %arg3: memref<1x512xf32, #tpu.memory_space<vmem>>, %arg4: memref<512x128xf32, #tpu.memory_space<vmem>>, %arg5: memref<1x128xf32, #tpu.memory_space<vmem>>, %arg6: memref<128x128xf32, #tpu.memory_space<vmem>>, %arg7: memref<1x128xf32, #tpu.memory_space<vmem>>, %arg8: memref<8x128xf32, #tpu.memory_space<vmem>>) attributes {dimension_semantics = [#tpu.dimension_semantics<parallel>], iteration_bounds = array<i64: 1>, scalar_prefetch = 0 : i64, scratch_operands = 0 : i64, tpu.core_type = #tpu.core_type<tc>, window_params = [{transform_indices = @transform_0, window_bounds = array<i64: 8, 16>}, {pipeline_mode = #tpu.pipeline_mode<synchronous>, transform_indices = @transform_1, window_bounds = array<i64: 16, 512>}, {pipeline_mode = #tpu.pipeline_mode<synchronous>, transform_indices = @transform_2, window_bounds = array<i64: 1, 512>}, {pipeline_mode = #tpu.pipeline_mode<synchronous>, transform_indices = @transform_3, window_bounds = array<i64: 512, 128>}, {pipeline_mode = #tpu.pipeline_mode<synchronous>, transform_indices = @transform_4, window_bounds = array<i64: 1, 128>}, {pipeline_mode = #tpu.pipeline_mode<synchronous>, transform_indices = @transform_5, window_bounds = array<i64: 128, 128>}, {pipeline_mode = #tpu.pipeline_mode<synchronous>, transform_indices = @transform_6, window_bounds = array<i64: 1, 128>}, {transform_indices = @transform_7, window_bounds = array<i64: 8, 128>}]} {
    %c0 = arith.constant 0 : index
    %c0_0 = arith.constant 0 : index
    %0 = vector.load %arg1[%c0, %c0_0] : memref<8x16xf32, #tpu.memory_space<vmem>>, vector<8x16xf32>
    %c0_1 = arith.constant 0 : index
    %c0_2 = arith.constant 0 : index
    %1 = vector.load %arg2[%c0_1, %c0_2] : memref<16x512xf32, #tpu.memory_space<vmem>>, vector<16x512xf32>
    %cst = arith.constant dense<0.000000e+00> : vector<8x512xf32>
    %2 = tpu.matmul %0, %1, %cst {dimension_numbers = #tpu.dot_dimension_numbers<[1], [0], [0], [1], [0, 0, 1, 1], [], []>} : vector<8x16xf32>, vector<16x512xf32>, vector<8x512xf32> -> vector<8x512xf32>
    %c0_3 = arith.constant 0 : index
    %c0_4 = arith.constant 0 : index
    %3 = vector.load %arg3[%c0_3, %c0_4] : memref<1x512xf32, #tpu.memory_space<vmem>>, vector<1x512xf32>
    %4 = vector.broadcast %3 : vector<1x512xf32> to vector<8x512xf32>
    %5 = arith.addf %2, %4 : vector<8x512xf32>
    %cst_5 = arith.constant 0.000000e+00 : f32
    %6 = vector.broadcast %cst_5 : f32 to vector<8x512xf32>
    %7 = arith.maximumf %5, %6 : vector<8x512xf32>
    %c0_6 = arith.constant 0 : index
    %c0_7 = arith.constant 0 : index
    %8 = vector.load %arg4[%c0_6, %c0_7] : memref<512x128xf32, #tpu.memory_space<vmem>>, vector<512x128xf32>
    %cst_8 = arith.constant dense<0.000000e+00> : vector<8x128xf32>
    %9 = tpu.matmul %7, %8, %cst_8 {dimension_numbers = #tpu.dot_dimension_numbers<[1], [0], [0], [1], [0, 0, 1, 1], [], []>} : vector<8x512xf32>, vector<512x128xf32>, vector<8x128xf32> -> vector<8x128xf32>
    %c0_9 = arith.constant 0 : index
    %c0_10 = arith.constant 0 : index
    %10 = vector.load %arg5[%c0_9, %c0_10] : memref<1x128xf32, #tpu.memory_space<vmem>>, vector<1x128xf32>
    %11 = vector.broadcast %10 : vector<1x128xf32> to vector<8x128xf32>
    %12 = arith.addf %9, %11 : vector<8x128xf32>
    %cst_11 = arith.constant 0.000000e+00 : f32
    %13 = vector.broadcast %cst_11 : f32 to vector<8x128xf32>
    %14 = arith.maximumf %12, %13 : vector<8x128xf32>
    %c0_12 = arith.constant 0 : index
    %c0_13 = arith.constant 0 : index
    %15 = vector.load %arg6[%c0_12, %c0_13] : memref<128x128xf32, #tpu.memory_space<vmem>>, vector<128x128xf32>
    %cst_14 = arith.constant dense<0.000000e+00> : vector<8x128xf32>
    %16 = tpu.matmul %14, %15, %cst_14 {dimension_numbers = #tpu.dot_dimension_numbers<[1], [0], [0], [1], [0, 0, 1, 1], [], []>} : vector<8x128xf32>, vector<128x128xf32>, vector<8x128xf32> -> vector<8x128xf32>
    %c0_15 = arith.constant 0 : index
    %c0_16 = arith.constant 0 : index
    %17 = vector.load %arg7[%c0_15, %c0_16] : memref<1x128xf32, #tpu.memory_space<vmem>>, vector<1x128xf32>
    %18 = vector.broadcast %17 : vector<1x128xf32> to vector<8x128xf32>
    %19 = arith.addf %16, %18 : vector<8x128xf32>
    %20 = math.tanh %19 : vector<8x128xf32>
    %c0_17 = arith.constant 0 : index
    %c0_18 = arith.constant 0 : index
    %21 = vector.load %arg8[%c0_17, %c0_18] : memref<8x128xf32, #tpu.memory_space<vmem>>, vector<8x128xf32>
    tpu.vector_store %arg8[%c0_17, %c0_18], %20 {strides = array<i32>} : memref<8x128xf32, #tpu.memory_space<vmem>>, vector<8x128xf32>,
    return
  }
  func.func @transform_0(%arg0: i32) -> (i32, i32) {
    %c0_i32 = arith.constant 0 : i32
    %c0_i32_0 = arith.constant 0 : i32
    return %arg0, %c0_i32 : i32, i32
  }
  func.func @transform_1(%arg0: i32) -> (i32, i32) {
    %c0_i32 = arith.constant 0 : i32
    %c0_i32_0 = arith.constant 0 : i32
    %c0_i32_1 = arith.constant 0 : i32
    return %c0_i32, %c0_i32_0 : i32, i32
  }
  func.func @transform_2(%arg0: i32) -> (i32, i32) {
    %c0_i32 = arith.constant 0 : i32
    %c0_i32_0 = arith.constant 0 : i32
    %c0_i32_1 = arith.constant 0 : i32
    return %c0_i32, %c0_i32_0 : i32, i32
  }
  func.func @transform_3(%arg0: i32) -> (i32, i32) {
    %c0_i32 = arith.constant 0 : i32
    %c0_i32_0 = arith.constant 0 : i32
    %c0_i32_1 = arith.constant 0 : i32
    return %c0_i32, %c0_i32_0 : i32, i32
  }
  func.func @transform_4(%arg0: i32) -> (i32, i32) {
    %c0_i32 = arith.constant 0 : i32
    %c0_i32_0 = arith.constant 0 : i32
    %c0_i32_1 = arith.constant 0 : i32
    return %c0_i32, %c0_i32_0 : i32, i32
  }
  func.func @transform_5(%arg0: i32) -> (i32, i32) {
    %c0_i32 = arith.constant 0 : i32
    %c0_i32_0 = arith.constant 0 : i32
    %c0_i32_1 = arith.constant 0 : i32
    return %c0_i32, %c0_i32_0 : i32, i32
  }
  func.func @transform_6(%arg0: i32) -> (i32, i32) {
    %c0_i32 = arith.constant 0 : i32
    %c0_i32_0 = arith.constant 0 : i32
    %c0_i32_1 = arith.constant 0 : i32
    return %c0_i32, %c0_i32_0 : i32, i32
  }
  func.func @transform_7(%arg0: i32) -> (i32, i32) {
    %c0_i32 = arith.constant 0 : i32
    %c0_i32_0 = arith.constant 0 : i32
    return %arg0, %c0_i32 : i32, i32
  }
}

</mosaic_0001>

<llo_original>
// kernel: actor_net_forward.1
$region0: #{actor_net_forward.1}
  #allocation0 [shape = 'u32[]', space=smem, size = 0x4, offset = 0x4, fixed_abs, tag = 'smem constant byte address 0x4 - core index']
  #allocation1 [shape = 'u32[144,128]{1,0:T(1,128)}', space=vmem, size = 0x12000, scoped, tag = 'internal scratch']
  %s0 = inlined_call_operand.vmem [shape: f32[8,16], index: 0, kind: input, shape index: {}]
  %s1 = inlined_call_operand.vmem [shape: f32[16,512], index: 1, kind: input, shape index: {}]
  %s2 = inlined_call_operand.vmem [shape: f32[1,512], index: 2, kind: input, shape index: {}]
  %s3 = inlined_call_operand.vmem [shape: f32[512,128], index: 3, kind: input, shape index: {}]
  %s4 = inlined_call_operand.vmem [shape: f32[1,128], index: 4, kind: input, shape index: {}]
  %s5 = inlined_call_operand.vmem [shape: f32[128,128], index: 5, kind: input, shape index: {}]
  %s6 = inlined_call_operand.vmem [shape: f32[1,128], index: 6, kind: input, shape index: {}]
  %s7 = inlined_call_operand.vmem [shape: f32[8,128], index: 7, kind: output, shape index: {}]
  %s8 = sld [smem:[#allocation0]]
  $region38: #{actor_net_forward.1} parent=0
    _
  %s10 = ssub.s32 1, %s8
  %s11 = scalar_select 0, %s10, %s8
  // Predicated region
  $region2: #{actor_net_forward.1} parent=0 // pred_check
    _
  $region3: #{actor_net_forward.1} parent=0 // pred_check_branch
    %13 = sbr.rel (0) target = $region5
  $region4: #{actor_net_forward.1} parent=0 // pred_region
    _
  $region5: #{actor_net_forward.1} parent=0 // pred_fallthru
    _
  // Predicated region
  $region6: #{actor_net_forward.1} parent=0 // pred_check
    _
  $region7: #{actor_net_forward.1} parent=0 // pred_check_branch
    %15 = sbr.rel (0) target = $region9
  $region8: #{actor_net_forward.1} parent=0 // pred_region
    _
  $region9: #{actor_net_forward.1} parent=0 // pred_fallthru
    _
  // Predicated region
  $region10: #{actor_net_forward.1} parent=0 // pred_check
    _
  $region11: #{actor_net_forward.1} parent=0 // pred_check_branch
    %17 = sbr.rel (0) target = $region13
  $region12: #{actor_net_forward.1} parent=0 // pred_region
    _
  $region13: #{actor_net_forward.1} parent=0 // pred_fallthru
    _
  // Predicated region
  $region14: #{actor_net_forward.1} parent=0 // pred_check
    _
  $region15: #{actor_net_forward.1} parent=0 // pred_check_branch
    %19 = sbr.rel (0) target = $region17
  $region16: #{actor_net_forward.1} parent=0 // pred_region
    _
  $region17: #{actor_net_forward.1} parent=0 // pred_fallthru
    _
  // Predicated region
  $region18: #{actor_net_forward.1} parent=0 // pred_check
    _
  $region19: #{actor_net_forward.1} parent=0 // pred_check_branch
    %21 = sbr.rel (0) target = $region21
  $region20: #{actor_net_forward.1} parent=0 // pred_region
    _
  $region21: #{actor_net_forward.1} parent=0 // pred_fallthru
    _
  // Predicated region
  $region22: #{actor_net_forward.1} parent=0 // pred_check
    _
  $region23: #{actor_net_forward.1} parent=0 // pred_check_branch
    %23 = sbr.rel (0) target = $region25
  $region24: #{actor_net_forward.1} parent=0 // pred_region
    _
  $region25: #{actor_net_forward.1} parent=0 // pred_fallthru
    _
  // Predicated region
  $region26: #{actor_net_forward.1} parent=0 // pred_check
    _
  $region27: #{actor_net_forward.1} parent=0 // pred_check_branch
    %25 = sbr.rel (0) target = $region29
  $region28: #{actor_net_forward.1} parent=0 // pred_region
    _
  $region29: #{actor_net_forward.1} parent=0 // pred_fallthru
    _
  %v26 = vld [vmem:[%s0] sm:$0xff]
  %v27 = vld [vmem:[%s1] sm:$0xff]
  %v28 = vld [vmem:[%s1 + $0x8] sm:$0xff]
  %v29 = vld [vmem:[%s1 + $0x10] sm:$0xff]
  %v30 = vld [vmem:[%s1 + $0x18] sm:$0xff]
  %v31 = vld [vmem:[%s1 + $0x20] sm:$0xff]
  %v32 = vld [vmem:[%s1 + $0x28] sm:$0xff]
  %v33 = vld [vmem:[%s1 + $0x30] sm:$0xff]
  %v34 = vld [vmem:[%s1 + $0x38] sm:$0xff]
  %v35 = vld [vmem:[%s2] sm:$0xf]
  %v37 = vlaneseq
  %v38 = vshrl.u32 %v37, 7
  %v39 = vsub.s32 0, %v38
  %v40 = vrot.slane %v35, %v39
  %v41 = vlaneseq
  %v42 = vshrl.u32 %v41, 7
  %v43 = vsub.s32 1, %v42
  %v44 = vrot.slane %v35, %v43
  %v45 = vlaneseq
  %v46 = vshrl.u32 %v45, 7
  %v47 = vsub.s32 2, %v46
  %v48 = vrot.slane %v35, %v47
  %v49 = vlaneseq
  %v50 = vshrl.u32 %v49, 7
  %v51 = vsub.s32 3, %v50
  %v52 = vrot.slane %v35, %v51
  %vm57 = vcmask 130048
  %v59 = vsel %vm57, %v26, 0
  %61 = vmatprep.subr.mxu0 0.0
  %62 = vmatpush1.msra.mxu0 0.0
  %63 = vmatprep.subr.mxu0 0.0
  %64 = vmatpush1.msra.mxu0 0.0
  %65 = vmatprep.subr.mxu0 0.0
  %66 = vmatpush1.msra.mxu0 0.0
  %67 = vmatprep.subr.mxu0 0.0
  %68 = vmatpush1.msra.mxu0 0.0
  %69 = vmatprep.subr.mxu0 0.0
  %70 = vmatpush1.msra.mxu0 0.0
  %71 = vmatprep.subr.mxu0 0.0
  %72 = vmatpush1.msra.mxu0 0.0
  %73 = vmatprep.subr.mxu0 0.0
  %74 = vmatpush1.msra.mxu0 0.0
  %75 = vmatprep.subr.mxu0 0.0
  %76 = vmatpush1.msra.mxu0 0.0
  %77 = vmatprep.subr.mxu0 0.0
  %78 = vmatpush1.msra.mxu0 0.0
  %79 = vmatprep.subr.mxu0 0.0
  %80 = vmatpush1.msra.mxu0 0.0
  %81 = vmatprep.subr.mxu0 0.0
  %82 = vmatpush1.msra.mxu0 0.0
  %83 = vmatprep.subr.mxu0 0.0
  %84 = vmatpush1.msra.mxu0 0.0
  %85 = vmatprep.subr.mxu0 0.0
  %86 = vmatpush1.msra.mxu0 0.0
  %87 = vmatprep.subr.mxu0 0.0
  %88 = vmatpush1.msra.mxu0 0.0
  %89 = vmatprep.subr.mxu0 %v32
  %90 = vmatpush1.msra.mxu0 %v31
  %91 = vmatprep.subr.mxu0 %v28
  %92 = vmatpush1.msra.mxu0 %v27
  %93 = vmatprep.subr.mxu0 0.0
  %94 = vmatpush2.msra.mxu0 0.0
  %95 = vmatprep.subr.mxu0 0.0
  %96 = vmatpush2.msra.mxu0 0.0
  %97 = vmatprep.subr.mxu0 0.0
  %98 = vmatpush2.msra.mxu0 0.0
  %99 = vmatprep.subr.mxu0 0.0
  %100 = vmatpush2.msra.mxu0 0.0
  %101 = vmatprep.subr.mxu0 0.0
  %102 = vmatpush2.msra.mxu0 0.0
  %103 = vmatprep.subr.mxu0 0.0
  %104 = vmatpush2.msra.mxu0 0.0
  %105 = vmatprep.subr.mxu0 0.0
  %106 = vmatpush2.msra.mxu0 0.0
  %107 = vmatprep.subr.mxu0 0.0
  %108 = vmatpush2.msra.mxu0 0.0
  %109 = vmatprep.subr.mxu0 0.0
  %110 = vmatpush2.msra.mxu0 0.0
  %111 = vmatprep.subr.mxu0 0.0
  %112 = vmatpush2.msra.mxu0 0.0
  %113 = vmatprep.subr.mxu0 0.0
  %114 = vmatpush2.msra.mxu0 0.0
  %115 = vmatprep.subr.mxu0 0.0
  %116 = vmatpush2.msra.mxu0 0.0
  %117 = vmatprep.subr.mxu0 0.0
  %118 = vmatpush2.msra.mxu0 0.0
  %119 = vmatprep.subr.mxu0 0.0
  %120 = vmatpush2.msra.mxu0 0.0
  %121 = vmatprep.subr.mxu0 0.0
  %122 = vmatpush2.msra.mxu0 0.0
  %123 = vmatprep.subr.mxu0 0.0
  %124 = vmatpush2.msra.mxu0 0.0
  %125 = vmatprep.mubr.f32.mxu0 0.0
  %126 = vmatmul.mubr.f32.gmra.mxu0 %v59
  %v127 = vpop.f32.mrf.mxu0
  %v128 = vadd.f32 %v40, %v127
  %v129 = vpop.f32.mrf.mxu0
  %v130 = vadd.f32 %v44, %v129
  %131 = vdwg.mxu0
  %132 = vmatprep.subr.mxu0 0.0
  %133 = vmatpush1.msra.mxu0 0.0
  %134 = vmatprep.subr.mxu0 0.0
  %135 = vmatpush1.msra.mxu0 0.0
  %136 = vmatprep.subr.mxu0 0.0
  %137 = vmatpush1.msra.mxu0 0.0
  %138 = vmatprep.subr.mxu0 0.0
  %139 = vmatpush1.msra.mxu0 0.0
  %140 = vmatprep.subr.mxu0 0.0
  %141 = vmatpush1.msra.mxu0 0.0
  %142 = vmatprep.subr.mxu0 0.0
  %143 = vmatpush1.msra.mxu0 0.0
  %144 = vmatprep.subr.mxu0 0.0
  %145 = vmatpush1.msra.mxu0 0.0
  %146 = vmatprep.subr.mxu0 0.0
  %147 = vmatpush1.msra.mxu0 0.0
  %148 = vmatprep.subr.mxu0 0.0
  %149 = vmatpush1.msra.mxu0 0.0
  %150 = vmatprep.subr.mxu0 0.0
  %151 = vmatpush1.msra.mxu0 0.0
  %152 = vmatprep.subr.mxu0 0.0
  %153 = vmatpush1.msra.mxu0 0.0
  %154 = vmatprep.subr.mxu0 0.0
  %155 = vmatpush1.msra.mxu0 0.0
  %156 = vmatprep.subr.mxu0 0.0
  %157 = vmatpush1.msra.mxu0 0.0
  %158 = vmatprep.subr.mxu0 0.0
  %159 = vmatpush1.msra.mxu0 0.0
  %160 = vmatprep.subr.mxu0 %v34
  %161 = vmatpush1.msra.mxu0 %v33
  %162 = vmatprep.subr.mxu0 %v30
  %163 = vmatpush1.msra.mxu0 %v29
  %164 = vmatprep.subr.mxu0 0.0
  %165 = vmatpush2.msra.mxu0 0.0
  %166 = vmatprep.subr.mxu0 0.0
  %167 = vmatpush2.msra.mxu0 0.0
  %168 = vmatprep.subr.mxu0 0.0
  %169 = vmatpush2.msra.mxu0 0.0
  %170 = vmatprep.subr.mxu0 0.0
  %171 = vmatpush2.msra.mxu0 0.0
  %172 = vmatprep.subr.mxu0 0.0
  %173 = vmatpush2.msra.mxu0 0.0
  %174 = vmatprep.subr.mxu0 0.0
  %175 = vmatpush2.msra.mxu0 0.0
  %176 = vmatprep.subr.mxu0 0.0
  %177 = vmatpush2.msra.mxu0 0.0
  %178 = vmatprep.subr.mxu0 0.0
  %179 = vmatpush2.msra.mxu0 0.0
  %180 = vmatprep.subr.mxu0 0.0
  %181 = vmatpush2.msra.mxu0 0.0
  %182 = vmatprep.subr.mxu0 0.0
  %183 = vmatpush2.msra.mxu0 0.0
  %184 = vmatprep.subr.mxu0 0.0
  %185 = vmatpush2.msra.mxu0 0.0
  %186 = vmatprep.subr.mxu0 0.0
  %187 = vmatpush2.msra.mxu0 0.0
  %188 = vmatprep.subr.mxu0 0.0
  %189 = vmatpush2.msra.mxu0 0.0
  %190 = vmatprep.subr.mxu0 0.0
  %191 = vmatpush2.msra.mxu0 0.0
  %192 = vmatprep.subr.mxu0 0.0
  %193 = vmatpush2.msra.mxu0 0.0
  %194 = vmatprep.subr.mxu0 0.0
  %195 = vmatpush2.msra.mxu0 0.0
  %196 = vmatprep.mubr.f32.mxu0 0.0
  %197 = vmatmul.mubr.f32.gmra.mxu0 %v59
  %v198 = vpop.f32.mrf.mxu0
  %v199 = vadd.f32 %v48, %v198
  %v200 = vpop.f32.mrf.mxu0
  %v201 = vadd.f32 %v52, %v200
  %202 = vdwg.mxu0
  %v203 = vmax.f32 %v128, 0.0
  %v204 = vmax.f32 %v130, 0.0
  %v205 = vmax.f32 %v199, 0.0
  %v206 = vmax.f32 %v201, 0.0
  %v207 = vld [vmem:[%s3] sm:$0xff]
  %v208 = vld [vmem:[%s3 + $0x8] sm:$0xff]
  %v209 = vld [vmem:[%s3 + $0x10] sm:$0xff]
  %v210 = vld [vmem:[%s3 + $0x18] sm:$0xff]
  %v211 = vld [vmem:[%s3 + $0x20] sm:$0xff]
  %v212 = vld [vmem:[%s3 + $0x28] sm:$0xff]
  %v213 = vld [vmem:[%s3 + $0x30] sm:$0xff]
  %v214 = vld [vmem:[%s3 + $0x38] sm:$0xff]
  %v215 = vld [vmem:[%s3 + $0x40] sm:$0xff]
  %v216 = vld [vmem:[%s3 + $0x48] sm:$0xff]
  %v217 = vld [vmem:[%s3 + $0x50] sm:$0xff]
  %v218 = vld [vmem:[%s3 + $0x58] sm:$0xff]
  %v219 = vld [vmem:[%s3 + $0x60] sm:$0xff]
  %v220 = vld [vmem:[%s3 + $0x68] sm:$0xff]
  %v221 = vld [vmem:[%s3 + $0x70] sm:$0xff]
  %v222 = vld [vmem:[%s3 + $0x78] sm:$0xff]
  %v223 = vld [vmem:[%s3 + $0x80] sm:$0xff]
  %v224 = vld [vmem:[%s3 + $0x88] sm:$0xff]
  %v225 = vld [vmem:[%s3 + $0x90] sm:$0xff]
  %v226 = vld [vmem:[%s3 + $0x98] sm:$0xff]
  %v227 = vld [vmem:[%s3 + $0xa0] sm:$0xff]
  %v228 = vld [vmem:[%s3 + $0xa8] sm:$0xff]
  %v229 = vld [vmem:[%s3 + $0xb0] sm:$0xff]
  %v230 = vld [vmem:[%s3 + $0xb8] sm:$0xff]
  %v231 = vld [vmem:[%s3 + $0xc0] sm:$0xff]
  %v232 = vld [vmem:[%s3 + $0xc8] sm:$0xff]
  %v233 = vld [vmem:[%s3 + $0xd0] sm:$0xff]
  %v234 = vld [vmem:[%s3 + $0xd8] sm:$0xff]
  %v235 = vld [vmem:[%s3 + $0xe0] sm:$0xff]
  %v236 = vld [vmem:[%s3 + $0xe8] sm:$0xff]
  %v237 = vld [vmem:[%s3 + $0xf0] sm:$0xff]
  %v238 = vld [vmem:[%s3 + $0xf8] sm:$0xff]
  %v239 = vld [vmem:[%s3 + $0x100] sm:$0xff]
  %v240 = vld [vmem:[%s3 + $0x108] sm:$0xff]
  %v241 = vld [vmem:[%s3 + $0x110] sm:$0xff]
  %v242 = vld [vmem:[%s3 + $0x118] sm:$0xff]
  %v243 = vld [vmem:[%s3 + $0x120] sm:$0xff]
  %v244 = vld [vmem:[%s3 + $0x128] sm:$0xff]
  %v245 = vld [vmem:[%s3 + $0x130] sm:$0xff]
  %v246 = vld [vmem:[%s3 + $0x138] sm:$0xff]
  %v247 = vld [vmem:[%s3 + $0x140] sm:$0xff]
  %v248 = vld [vmem:[%s3 + $0x148] sm:$0xff]
  %v249 = vld [vmem:[%s3 + $0x150] sm:$0xff]
  %v250 = vld [vmem:[%s3 + $0x158] sm:$0xff]
  %v251 = vld [vmem:[%s3 + $0x160] sm:$0xff]
  %v252 = vld [vmem:[%s3 + $0x168] sm:$0xff]
  %v253 = vld [vmem:[%s3 + $0x170] sm:$0xff]
  %v254 = vld [vmem:[%s3 + $0x178] sm:$0xff]
  %v255 = vld [vmem:[%s3 + $0x180] sm:$0xff]
  %v256 = vld [vmem:[%s3 + $0x188] sm:$0xff]
  %v257 = vld [vmem:[%s3 + $0x190] sm:$0xff]
  %v258 = vld [vmem:[%s3 + $0x198] sm:$0xff]
  %v259 = vld [vmem:[%s3 + $0x1a0] sm:$0xff]
  %v260 = vld [vmem:[%s3 + $0x1a8] sm:$0xff]
  %v261 = vld [vmem:[%s3 + $0x1b0] sm:$0xff]
  %v262 = vld [vmem:[%s3 + $0x1b8] sm:$0xff]
  %v263 = vld [vmem:[%s3 + $0x1c0] sm:$0xff]
  %v264 = vld [vmem:[%s3 + $0x1c8] sm:$0xff]
  %v265 = vld [vmem:[%s3 + $0x1d0] sm:$0xff]
  %v266 = vld [vmem:[%s3 + $0x1d8] sm:$0xff]
  %v267 = vld [vmem:[%s3 + $0x1e0] sm:$0xff]
  %v268 = vld [vmem:[%s3 + $0x1e8] sm:$0xff]
  %v269 = vld [vmem:[%s3 + $0x1f0] sm:$0xff]
  %v270 = vld [vmem:[%s3 + $0x1f8] sm:$0xff]
  %v271 = vld [vmem:[%s4] sm:$0x1]
  %v273 = vlaneseq
  %v274 = vshrl.u32 %v273, 7
  %v275 = vsub.s32 0, %v274
  %v276 = vrot.slane %v271, %v275
  %278 = vmatprep.subr.mxu0 0.0
  %279 = vmatpush1.msra.mxu0 %v222
  %280 = vmatprep.subr.mxu0 0.0
  %281 = vmatpush1.msra.mxu0 %v221
  %282 = vmatprep.subr.mxu0 0.0
  %283 = vmatpush1.msra.mxu0 %v220
  %284 = vmatprep.subr.mxu0 0.0
  %285 = vmatpush1.msra.mxu0 %v219
  %286 = vmatprep.subr.mxu0 0.0
  %287 = vmatpush1.msra.mxu0 %v218
  %288 = vmatprep.subr.mxu0 0.0
  %289 = vmatpush1.msra.mxu0 %v217
  %290 = vmatprep.subr.mxu0 0.0
  %291 = vmatpush1.msra.mxu0 %v216
  %292 = vmatprep.subr.mxu0 0.0
  %293 = vmatpush1.msra.mxu0 %v215
  %294 = vmatprep.subr.mxu0 0.0
  %295 = vmatpush1.msra.mxu0 %v214
  %296 = vmatprep.subr.mxu0 0.0
  %297 = vmatpush1.msra.mxu0 %v213
  %298 = vmatprep.subr.mxu0 0.0
  %299 = vmatpush1.msra.mxu0 %v212
  %300 = vmatprep.subr.mxu0 0.0
  %301 = vmatpush1.msra.mxu0 %v211
  %302 = vmatprep.subr.mxu0 0.0
  %303 = vmatpush1.msra.mxu0 %v210
  %304 = vmatprep.subr.mxu0 0.0
  %305 = vmatpush1.msra.mxu0 %v209
  %306 = vmatprep.subr.mxu0 0.0
  %307 = vmatpush1.msra.mxu0 %v208
  %308 = vmatprep.subr.mxu0 0.0
  %309 = vmatpush1.msra.mxu0 %v207
  %310 = vmatprep.subr.mxu0 0.0
  %311 = vmatpush2.msra.mxu0 %v238
  %312 = vmatprep.subr.mxu0 0.0
  %313 = vmatpush2.msra.mxu0 %v237
  %314 = vmatprep.subr.mxu0 0.0
  %315 = vmatpush2.msra.mxu0 %v236
  %316 = vmatprep.subr.mxu0 0.0
  %317 = vmatpush2.msra.mxu0 %v235
  %318 = vmatprep.subr.mxu0 0.0
  %319 = vmatpush2.msra.mxu0 %v234
  %320 = vmatprep.subr.mxu0 0.0
  %321 = vmatpush2.msra.mxu0 %v233
  %322 = vmatprep.subr.mxu0 0.0
  %323 = vmatpush2.msra.mxu0 %v232
  %324 = vmatprep.subr.mxu0 0.0
  %325 = vmatpush2.msra.mxu0 %v231
  %326 = vmatprep.subr.mxu0 0.0
  %327 = vmatpush2.msra.mxu0 %v230
  %328 = vmatprep.subr.mxu0 0.0
  %329 = vmatpush2.msra.mxu0 %v229
  %330 = vmatprep.subr.mxu0 0.0
  %331 = vmatpush2.msra.mxu0 %v228
  %332 = vmatprep.subr.mxu0 0.0
  %333 = vmatpush2.msra.mxu0 %v227
  %334 = vmatprep.subr.mxu0 0.0
  %335 = vmatpush2.msra.mxu0 %v226
  %336 = vmatprep.subr.mxu0 0.0
  %337 = vmatpush2.msra.mxu0 %v225
  %338 = vmatprep.subr.mxu0 0.0
  %339 = vmatpush2.msra.mxu0 %v224
  %340 = vmatprep.subr.mxu0 0.0
  %341 = vmatpush2.msra.mxu0 %v223
  %342 = vmatprep.mubr.f32.mxu0 %v204
  %343 = vmatmul.mubr.f32.gmra.mxu0 %v203
  %v344 = vpop.f32.mrf.mxu0
  %v345 = vadd.f32 %v276, %v344
  %v346 = vpop.f32.mrf.mxu0
  %347 = vdwg.mxu0
  %348 = vmatprep.subr.mxu0 0.0
  %349 = vmatpush1.msra.mxu0 %v254
  %350 = vmatprep.subr.mxu0 0.0
  %351 = vmatpush1.msra.mxu0 %v253
  %352 = vmatprep.subr.mxu0 0.0
  %353 = vmatpush1.msra.mxu0 %v252
  %354 = vmatprep.subr.mxu0 0.0
  %355 = vmatpush1.msra.mxu0 %v251
  %356 = vmatprep.subr.mxu0 0.0
  %357 = vmatpush1.msra.mxu0 %v250
  %358 = vmatprep.subr.mxu0 0.0
  %359 = vmatpush1.msra.mxu0 %v249
  %360 = vmatprep.subr.mxu0 0.0
  %361 = vmatpush1.msra.mxu0 %v248
  %362 = vmatprep.subr.mxu0 0.0
  %363 = vmatpush1.msra.mxu0 %v247
  %364 = vmatprep.subr.mxu0 0.0
  %365 = vmatpush1.msra.mxu0 %v246
  %366 = vmatprep.subr.mxu0 0.0
  %367 = vmatpush1.msra.mxu0 %v245
  %368 = vmatprep.subr.mxu0 0.0
  %369 = vmatpush1.msra.mxu0 %v244
  %370 = vmatprep.subr.mxu0 0.0
  %371 = vmatpush1.msra.mxu0 %v243
  %372 = vmatprep.subr.mxu0 0.0
  %373 = vmatpush1.msra.mxu0 %v242
  %374 = vmatprep.subr.mxu0 0.0
  %375 = vmatpush1.msra.mxu0 %v241
  %376 = vmatprep.subr.mxu0 0.0
  %377 = vmatpush1.msra.mxu0 %v240
  %378 = vmatprep.subr.mxu0 0.0
  %379 = vmatpush1.msra.mxu0 %v239
  %380 = vmatprep.subr.mxu0 0.0
  %381 = vmatpush2.msra.mxu0 %v270
  %382 = vmatprep.subr.mxu0 0.0
  %383 = vmatpush2.msra.mxu0 %v269
  %384 = vmatprep.subr.mxu0 0.0
  %385 = vmatpush2.msra.mxu0 %v268
  %386 = vmatprep.subr.mxu0 0.0
  %387 = vmatpush2.msra.mxu0 %v267
  %388 = vmatprep.subr.mxu0 0.0
  %389 = vmatpush2.msra.mxu0 %v266
  %390 = vmatprep.subr.mxu0 0.0
  %391 = vmatpush2.msra.mxu0 %v265
  %392 = vmatprep.subr.mxu0 0.0
  %393 = vmatpush2.msra.mxu0 %v264
  %394 = vmatprep.subr.mxu0 0.0
  %395 = vmatpush2.msra.mxu0 %v263
  %396 = vmatprep.subr.mxu0 0.0
  %397 = vmatpush2.msra.mxu0 %v262
  %398 = vmatprep.subr.mxu0 0.0
  %399 = vmatpush2.msra.mxu0 %v261
  %400 = vmatprep.subr.mxu0 0.0
  %401 = vmatpush2.msra.mxu0 %v260
  %402 = vmatprep.subr.mxu0 0.0
  %403 = vmatpush2.msra.mxu0 %v259
  %404 = vmatprep.subr.mxu0 0.0
  %405 = vmatpush2.msra.mxu0 %v258
  %406 = vmatprep.subr.mxu0 0.0
  %407 = vmatpush2.msra.mxu0 %v257
  %408 = vmatprep.subr.mxu0 0.0
  %409 = vmatpush2.msra.mxu0 %v256
  %410 = vmatprep.subr.mxu0 0.0
  %411 = vmatpush2.msra.mxu0 %v255
  %412 = vmatprep.mubr.f32.mxu0 %v206
  %413 = vmatmul.mubr.f32.gmra.mxu0 %v205
  %v414 = vpop.f32.mrf.mxu0
  %v415 = vadd.f32 %v345, %v414
  %v416 = vpop.f32.mrf.mxu0
  %417 = vdwg.mxu0
  %v418 = vmax.f32 %v415, 0.0
  %v419 = vld [vmem:[%s5] sm:$0xff]
  %v420 = vld [vmem:[%s5 + $0x8] sm:$0xff]
  %v421 = vld [vmem:[%s5 + $0x10] sm:$0xff]
  %v422 = vld [vmem:[%s5 + $0x18] sm:$0xff]
  %v423 = vld [vmem:[%s5 + $0x20] sm:$0xff]
  %v424 = vld [vmem:[%s5 + $0x28] sm:$0xff]
  %v425 = vld [vmem:[%s5 + $0x30] sm:$0xff]
  %v426 = vld [vmem:[%s5 + $0x38] sm:$0xff]
  %v427 = vld [vmem:[%s5 + $0x40] sm:$0xff]
  %v428 = vld [vmem:[%s5 + $0x48] sm:$0xff]
  %v429 = vld [vmem:[%s5 + $0x50] sm:$0xff]
  %v430 = vld [vmem:[%s5 + $0x58] sm:$0xff]
  %v431 = vld [vmem:[%s5 + $0x60] sm:$0xff]
  %v432 = vld [vmem:[%s5 + $0x68] sm:$0xff]
  %v433 = vld [vmem:[%s5 + $0x70] sm:$0xff]
  %v434 = vld [vmem:[%s5 + $0x78] sm:$0xff]
  %v435 = vld [vmem:[%s6] sm:$0x1]
  %v437 = vlaneseq
  %v438 = vshrl.u32 %v437, 7
  %v439 = vsub.s32 0, %v438
  %v440 = vrot.slane %v435, %v439
  %442 = vmatprep.subr.mxu0 0.0
  %443 = vmatpush1.msra.mxu0 %v434
  %444 = vmatprep.subr.mxu0 0.0
  %445 = vmatpush1.msra.mxu0 %v433
  %446 = vmatprep.subr.mxu0 0.0
  %447 = vmatpush1.msra.mxu0 %v432
  %448 = vmatprep.subr.mxu0 0.0
  %449 = vmatpush1.msra.mxu0 %v431
  %450 = vmatprep.subr.mxu0 0.0
  %451 = vmatpush1.msra.mxu0 %v430
  %452 = vmatprep.subr.mxu0 0.0
  %453 = vmatpush1.msra.mxu0 %v429
  %454 = vmatprep.subr.mxu0 0.0
  %455 = vmatpush1.msra.mxu0 %v428
  %456 = vmatprep.subr.mxu0 0.0
  %457 = vmatpush1.msra.mxu0 %v427
  %458 = vmatprep.subr.mxu0 0.0
  %459 = vmatpush1.msra.mxu0 %v426
  %460 = vmatprep.subr.mxu0 0.0
  %461 = vmatpush1.msra.mxu0 %v425
  %462 = vmatprep.subr.mxu0 0.0
  %463 = vmatpush1.msra.mxu0 %v424
  %464 = vmatprep.subr.mxu0 0.0
  %465 = vmatpush1.msra.mxu0 %v423
  %466 = vmatprep.subr.mxu0 0.0
  %467 = vmatpush1.msra.mxu0 %v422
  %468 = vmatprep.subr.mxu0 0.0
  %469 = vmatpush1.msra.mxu0 %v421
  %470 = vmatprep.subr.mxu0 0.0
  %471 = vmatpush1.msra.mxu0 %v420
  %472 = vmatprep.subr.mxu0 0.0
  %473 = vmatpush1.msra.mxu0 %v419
  %474 = vmatprep.subr.mxu0 0.0
  %475 = vmatpush2.msra.mxu0 0.0
  %476 = vmatprep.subr.mxu0 0.0
  %477 = vmatpush2.msra.mxu0 0.0
  %478 = vmatprep.subr.mxu0 0.0
  %479 = vmatpush2.msra.mxu0 0.0
  %480 = vmatprep.subr.mxu0 0.0
  %481 = vmatpush2.msra.mxu0 0.0
  %482 = vmatprep.subr.mxu0 0.0
  %483 = vmatpush2.msra.mxu0 0.0
  %484 = vmatprep.subr.mxu0 0.0
  %485 = vmatpush2.msra.mxu0 0.0
  %486 = vmatprep.subr.mxu0 0.0
  %487 = vmatpush2.msra.mxu0 0.0
  %488 = vmatprep.subr.mxu0 0.0
  %489 = vmatpush2.msra.mxu0 0.0
  %490 = vmatprep.subr.mxu0 0.0
  %491 = vmatpush2.msra.mxu0 0.0
  %492 = vmatprep.subr.mxu0 0.0
  %493 = vmatpush2.msra.mxu0 0.0
  %494 = vmatprep.subr.mxu0 0.0
  %495 = vmatpush2.msra.mxu0 0.0
  %496 = vmatprep.subr.mxu0 0.0
  %497 = vmatpush2.msra.mxu0 0.0
  %498 = vmatprep.subr.mxu0 0.0
  %499 = vmatpush2.msra.mxu0 0.0
  %500 = vmatprep.subr.mxu0 0.0
  %501 = vmatpush2.msra.mxu0 0.0
  %502 = vmatprep.subr.mxu0 0.0
  %503 = vmatpush2.msra.mxu0 0.0
  %504 = vmatprep.subr.mxu0 0.0
  %505 = vmatpush2.msra.mxu0 0.0
  %506 = vmatprep.mubr.f32.mxu0 0.0
  %507 = vmatmul.mubr.f32.gmra.mxu0 %v418
  %v508 = vpop.f32.mrf.mxu0
  %v509 = vadd.f32 %v440, %v508
  %v510 = vpop.f32.mrf.mxu0
  %511 = vdwg.mxu0
  %v512 = vtanh.pop %v509
  %513 = vst [vmem:[%s7] sm:$0xff] %v512
  // Predicated region
  $region30: #{actor_net_forward.1} parent=0 // pred_check
    _
  $region31: #{actor_net_forward.1} parent=0 // pred_check_branch
    %515 = sbr.rel (0) target = $region33
  $region32: #{actor_net_forward.1} parent=0 // pred_region
    _
  $region33: #{actor_net_forward.1} parent=0 // pred_fallthru
    _
  // Predicated region
  $region34: #{actor_net_forward.1} parent=0 // pred_check
    _
  $region35: #{actor_net_forward.1} parent=0 // pred_check_branch
    %517 = sbr.rel (0) target = $region37
  $region36: #{actor_net_forward.1} parent=0 // pred_region
    _
  $region37: #{actor_net_forward.1} parent=0 // pred_fallthru
    _

</llo_original>
